<compile_context>
chip_gen: v7x
topology: tpu7x:2x2x1
jax: 0.10.0
libtpu: 0.0.40
codegen_flags: <defaults>
</compile_context>

<pallas_src>
import functools

import jax
import jax.numpy as jnp
import numpy as np
from jax import lax
from jax.experimental import pallas as pl
from jax.experimental.pallas import tpu as pltpu

EPS = 1e-5
# Conservative VMEM budget: fits v7x's 32 MiB default scoped VMEM (64 MiB
# physical) as well as v5e/v6e.  Tiles below are sized well within it.
_VMEM_LIMIT_BYTES = 32 * 1024 * 1024


def _row_tile(m, cap=512):
    """Largest row tile <= cap that divides m and is sublane(8)-aligned."""
    if m <= cap:
        return m
    start = cap - (cap % 8)
    for t in range(start, 7, -8):
        if m % t == 0:
            return t
    return m  # fallback: single block (block dim == full dim is always legal)


# --------------------------- Pallas kernels ---------------------------------

def conv_cat_kernel(taps_ref, w_ref, b_ref, o_ref, *, precision):
    # taps_ref: (TM, 25*Cin)  lane-dense im2col row tile
    # w_ref   : (25*Cin, 2*Cm) combined [conv3 | conv5] weight (conv3 rows are
    #           zero outside the centered 3x3 taps)
    # b_ref   : (1, 2*Cm)      o_ref: (TM, 2*Cm)
    # One big MXU contraction (K = 25*Cin) replaces 34 tiny K=Cin matmuls and
    # emits the concatenated output directly.
    o_ref[...] = (
        jnp.dot(taps_ref[...], w_ref[...],
                preferred_element_type=jnp.float32, precision=precision)
        + b_ref[...]
    )


def bn_relu_kernel(y_ref, scale_ref, shift_ref, o_ref):
    # Fused BatchNorm affine (precomputed per-channel scale/shift) + ReLU.
    o_ref[...] = jnp.maximum(y_ref[...] * scale_ref[...] + shift_ref[...], 0.0)


# --------------------------- pallas_call wrappers ----------------------------

def _conv_cat(taps, w_comb, b_comb, precision):
    m, k = taps.shape
    c2 = w_comb.shape[-1]
    tm = _row_tile(m)
    grid = (m // tm,)
    cost = pl.CostEstimate(
        flops=int(2 * m * k * c2),
        transcendentals=0,
        bytes_accessed=int(4 * (m * k + k * c2 + c2 + m * c2)),
    )
    kernel = functools.partial(conv_cat_kernel, precision=precision)
    return pl.pallas_call(
        kernel,
        out_shape=jax.ShapeDtypeStruct((m, c2), jnp.float32),
        grid=grid,
        in_specs=[
            pl.BlockSpec((tm, k), lambda i: (i, 0)),   # row tile, double-buffered
            pl.BlockSpec((k, c2), lambda i: (0, 0)),   # weights resident
            pl.BlockSpec((1, c2), lambda i: (0, 0)),   # bias resident
        ],
        out_specs=pl.BlockSpec((tm, c2), lambda i: (i, 0)),
        compiler_params=pltpu.CompilerParams(
            dimension_semantics=("parallel",),
            vmem_limit_bytes=_VMEM_LIMIT_BYTES,
        ),
        cost_estimate=cost,
    )(taps, w_comb, b_comb)


def _bn_relu(y, scale, shift):
    m, c2 = y.shape
    tm = _row_tile(m, cap=1024)
    grid = (m // tm,)
    return pl.pallas_call(
        bn_relu_kernel,
        out_shape=jax.ShapeDtypeStruct((m, c2), jnp.float32),
        grid=grid,
        in_specs=[
            pl.BlockSpec((tm, c2), lambda i: (i, 0)),
            pl.BlockSpec((1, c2), lambda i: (0, 0)),
            pl.BlockSpec((1, c2), lambda i: (0, 0)),
        ],
        out_specs=pl.BlockSpec((tm, c2), lambda i: (i, 0)),
        compiler_params=pltpu.CompilerParams(
            dimension_semantics=("parallel",),
            vmem_limit_bytes=_VMEM_LIMIT_BYTES,
        ),
    )(y, scale.reshape(1, c2), shift.reshape(1, c2))


# --------------------------- glue (layout / im2col) --------------------------

def _combined_weight(w3, b3, w5, b5):
    # w3: (3,3,Cin,Cm) HWIO, w5: (5,5,Cin,Cm) HWIO.
    # Zero-pad w3 onto the centered 3x3 taps of the 5x5 window and concatenate
    # along the output-channel axis so one matmul yields cat([conv3, conv5]).
    cin, cm = w5.shape[2], w5.shape[3]
    w3_pad = jnp.zeros((5, 5, cin, cm), jnp.float32).at[1:4, 1:4].set(w3)
    wc = jnp.concatenate([w3_pad, w5], axis=-1)            # (5,5,Cin,2*Cm)
    wc = wc.reshape(25 * cin, 2 * cm)                      # rows: (tap, cin)
    bc = jnp.concatenate([b3, b5]).reshape(1, 2 * cm)
    return wc, bc


def _im2col_5x5(x_nhwc):
    # Single lane-dense (M, 25*Cin) slab; column order (tap-major, then Cin)
    # matches the flattened row order of the combined weight.
    # TODO(synk): for production shapes, build the taps in-kernel from a haloed
    # activation band (memory_space=pl.ANY + make_async_copy) to avoid the
    # 25x im2col HBM materialization entirely.
    n, h, w, cin = x_nhwc.shape
    xpad = jnp.pad(x_nhwc, ((0, 0), (2, 2), (2, 2), (0, 0)))
    taps = jnp.concatenate(
        [xpad[:, kh:kh + h, kw:kw + w, :] for kh in range(5) for kw in range(5)],
        axis=-1)                                           # (N,H,W,25*Cin)
    return taps.reshape(n * h * w, 25 * cin)


def double_conv_block(x_nhwc, params, precision):
    n, h, w, _ = x_nhwc.shape
    w3, b3, w5, b5, gamma, beta = params
    cm = w3.shape[-1]
    wc, bc = _combined_weight(w3, b3, w5, b5)
    taps = _im2col_5x5(x_nhwc)
    y = _conv_cat(taps, wc, bc, precision)                 # (M, 2*Cm), pre-BN
    # BatchNorm2d training-mode stats (biased variance) over the FULL (N,H,W)
    # extent -- tiny per-channel vectors, done in plain JAX so the conv kernel
    # can stay M-tiled.  Normalize + ReLU is a fused Pallas elementwise pass.
    mean = jnp.mean(y, axis=0)
    var = jnp.mean(jnp.square(y - mean), axis=0)
    scale = gamma * lax.rsqrt(var + EPS)
    shift = beta - mean * scale
    out = _bn_relu(y, scale, shift)
    return out.reshape(n, h, w, 2 * cm)


def down_forward(x_nchw, params, precision=None):
    x = jnp.transpose(x_nchw, (0, 2, 3, 1))                # NCHW -> NHWC
    # MaxPool2d(2): pure data movement -> leave to XLA's fused reduce_window
    # instead of an extra HBM round trip through a dedicated Pallas kernel.
    x = lax.reduce_window(x, -jnp.inf, lax.max,
                          (1, 2, 2, 1), (1, 2, 2, 1), "VALID")
    x = double_conv_block(x, params["block1"], precision)
    x = double_conv_block(x, params["block2"], precision)
    return jnp.transpose(x, (0, 3, 1, 2))                  # NHWC -> NCHW


# --------------------------- parameters --------------------------------------

def init_down_params(key, in_channels, out_channels):
    mid = out_channels  # DoubleConv default: mid_channels = out_channels
    ks = jax.random.split(key, 8)

    def conv_w(k, ksz, cin, cout):
        fan_in = cin * ksz * ksz
        return jax.random.normal(k, (ksz, ksz, cin, cout), jnp.float32) / jnp.sqrt(fan_in)

    block1 = (conv_w(ks[0], 3, in_channels, mid),
              0.1 * jax.random.normal(ks[1], (mid,), jnp.float32),
              conv_w(ks[2], 5, in_channels, mid),
              0.1 * jax.random.normal(ks[3], (mid,), jnp.float32),
              jnp.ones((2 * mid,), jnp.float32),            # BN gamma
              jnp.zeros((2 * mid,), jnp.float32))           # BN beta
    block2 = (conv_w(ks[4], 3, 2 * mid, out_channels),
              0.1 * jax.random.normal(ks[5], (out_channels,), jnp.float32),
              conv_w(ks[6], 5, 2 * mid, out_channels),
              0.1 * jax.random.normal(ks[7], (out_channels,), jnp.float32),
              jnp.ones((2 * out_channels,), jnp.float32),
              jnp.zeros((2 * out_channels,), jnp.float32))
    return {"block1": block1, "block2": block2}


# --------------------------- pure-JAX reference -------------------------------

def _ref_down(x_nchw, params):
    x = jnp.transpose(x_nchw, (0, 2, 3, 1))
    x = lax.reduce_window(x, -jnp.inf, lax.max, (1, 2, 2, 1), (1, 2, 2, 1), "VALID")

    def block(x, p):
        w3, b3, w5, b5, gamma, beta = p
        dn = ("NHWC", "HWIO", "NHWC")
        o3 = lax.conv_general_dilated(x, w3, (1, 1), [(1, 1), (1, 1)],
                                      dimension_numbers=dn,
                                      precision=lax.Precision.HIGHEST) + b3
        o5 = lax.conv_general_dilated(x, w5, (1, 1), [(2, 2), (2, 2)],
                                      dimension_numbers=dn,
                                      precision=lax.Precision.HIGHEST) + b5
        y = jnp.concatenate([o3, o5], axis=-1)
        mean = jnp.mean(y, axis=(0, 1, 2), keepdims=True)
        var = jnp.mean((y - mean) ** 2, axis=(0, 1, 2), keepdims=True)
        y = (y - mean) * lax.rsqrt(var + EPS) * gamma + beta
        return jnp.maximum(y, 0.0)

    x = block(x, params["block1"])
    x = block(x, params["block2"])
    return jnp.transpose(x, (0, 3, 1, 2))


# --------------------------- main ---------------------------------------------

if __name__ == "__main__":
    key = jax.random.PRNGKey(0)
    kx, kp = jax.random.split(key)
    N, C_IN, H, W = 2, 4, 16, 16
    OUT_CH = 8                        # Down(4, 8) -> output has 2*8 = 16 channels
    x = jax.random.normal(kx, (N, C_IN, H, W), jnp.float32)
    params = init_down_params(kp, C_IN, OUT_CH)

    fwd = jax.jit(down_forward, static_argnames="precision")

    # Perf path: native MXU precision (bf16 passes on v6e/v7x), per review.
    y = jax.block_until_ready(fwd(x, params))
    assert y.shape == (N, 2 * OUT_CH, H // 2, W // 2), y.shape

    # Tight structural check: same kernel, matmul pinned to HIGHEST, vs f32 ref.
    y_hi = jax.block_until_ready(fwd(x, params, precision=lax.Precision.HIGHEST))
    y_ref = _ref_down(x, params)
    np.testing.assert_allclose(np.asarray(y_hi), np.asarray(y_ref),
                               atol=1e-3, rtol=1e-3)
    # Loose check that the native-precision perf path is numerically sane
    # (difference is purely MXU bf16-pass rounding; real bugs would be O(1)).
    np.testing.assert_allclose(np.asarray(y), np.asarray(y_ref),
                               atol=5e-2, rtol=5e-2)
    print("KERNEL_OK")
</pallas_src>

<mosaic_0001>
module attributes {stable_mosaic.version = 11 : i64} {
  func.func @conv_cat_kernel(%arg0: i32, %arg1: memref<128x100xf32, #tpu.memory_space<vmem>>, %arg2: memref<100x16xf32, #tpu.memory_space<vmem>>, %arg3: memref<1x16xf32, #tpu.memory_space<vmem>>, %arg4: memref<128x16xf32, #tpu.memory_space<vmem>>) attributes {dimension_semantics = [#tpu.dimension_semantics<parallel>], iteration_bounds = array<i64: 1>, scalar_prefetch = 0 : i64, scratch_operands = 0 : i64, tpu.core_type = #tpu.core_type<tc>, window_params = [{transform_indices = @transform_0, window_bounds = array<i64: 128, 100>}, {pipeline_mode = #tpu.pipeline_mode<synchronous>, transform_indices = @transform_1, window_bounds = array<i64: 100, 16>}, {pipeline_mode = #tpu.pipeline_mode<synchronous>, transform_indices = @transform_2, window_bounds = array<i64: 1, 16>}, {transform_indices = @transform_3, window_bounds = array<i64: 128, 16>}]} {
    %c0 = arith.constant 0 : index
    %c0_0 = arith.constant 0 : index
    %0 = vector.load %arg1[%c0, %c0_0] : memref<128x100xf32, #tpu.memory_space<vmem>>, vector<128x100xf32>
    %c0_1 = arith.constant 0 : index
    %c0_2 = arith.constant 0 : index
    %1 = vector.load %arg2[%c0_1, %c0_2] : memref<100x16xf32, #tpu.memory_space<vmem>>, vector<100x16xf32>
    %cst = arith.constant dense<0.000000e+00> : vector<128x16xf32>
    %2 = tpu.matmul %0, %1, %cst {dimension_numbers = #tpu.dot_dimension_numbers<[1], [0], [0], [1], [0, 0, 1, 1], [], []>} : vector<128x100xf32>, vector<100x16xf32>, vector<128x16xf32> -> vector<128x16xf32>
    %c0_3 = arith.constant 0 : index
    %c0_4 = arith.constant 0 : index
    %3 = vector.load %arg3[%c0_3, %c0_4] : memref<1x16xf32, #tpu.memory_space<vmem>>, vector<1x16xf32>
    %4 = vector.broadcast %3 : vector<1x16xf32> to vector<128x16xf32>
    %5 = arith.addf %2, %4 : vector<128x16xf32>
    %c0_5 = arith.constant 0 : index
    %c0_6 = arith.constant 0 : index
    %6 = vector.load %arg4[%c0_5, %c0_6] : memref<128x16xf32, #tpu.memory_space<vmem>>, vector<128x16xf32>
    tpu.vector_store %arg4[%c0_5, %c0_6], %5 {strides = array<i32>} : memref<128x16xf32, #tpu.memory_space<vmem>>, vector<128x16xf32>,
    return
  }
  func.func @transform_0(%arg0: i32) -> (i32, i32) {
    %c0_i32 = arith.constant 0 : i32
    %c0_i32_0 = arith.constant 0 : i32
    return %arg0, %c0_i32 : i32, i32
  }
  func.func @transform_1(%arg0: i32) -> (i32, i32) {
    %c0_i32 = arith.constant 0 : i32
    %c0_i32_0 = arith.constant 0 : i32
    %c0_i32_1 = arith.constant 0 : i32
    return %c0_i32, %c0_i32_0 : i32, i32
  }
  func.func @transform_2(%arg0: i32) -> (i32, i32) {
    %c0_i32 = arith.constant 0 : i32
    %c0_i32_0 = arith.constant 0 : i32
    %c0_i32_1 = arith.constant 0 : i32
    return %c0_i32, %c0_i32_0 : i32, i32
  }
  func.func @transform_3(%arg0: i32) -> (i32, i32) {
    %c0_i32 = arith.constant 0 : i32
    %c0_i32_0 = arith.constant 0 : i32
    return %arg0, %c0_i32 : i32, i32
  }
}

module attributes {stable_mosaic.version = 11 : i64} {
  func.func @bn_relu_kernel(%arg0: i32, %arg1: memref<128x16xf32, #tpu.memory_space<vmem>>, %arg2: memref<1x16xf32, #tpu.memory_space<vmem>>, %arg3: memref<1x16xf32, #tpu.memory_space<vmem>>, %arg4: memref<128x16xf32, #tpu.memory_space<vmem>>) attributes {dimension_semantics = [#tpu.dimension_semantics<parallel>], iteration_bounds = array<i64: 1>, scalar_prefetch = 0 : i64, scratch_operands = 0 : i64, tpu.core_type = #tpu.core_type<tc>, window_params = [{transform_indices = @transform_0, window_bounds = array<i64: 128, 16>}, {pipeline_mode = #tpu.pipeline_mode<synchronous>, transform_indices = @transform_1, window_bounds = array<i64: 1, 16>}, {pipeline_mode = #tpu.pipeline_mode<synchronous>, transform_indices = @transform_2, window_bounds = array<i64: 1, 16>}, {transform_indices = @transform_3, window_bounds = array<i64: 128, 16>}]} {
    %c0 = arith.constant 0 : index
    %c0_0 = arith.constant 0 : index
    %0 = vector.load %arg1[%c0, %c0_0] : memref<128x16xf32, #tpu.memory_space<vmem>>, vector<128x16xf32>
    %c0_1 = arith.constant 0 : index
    %c0_2 = arith.constant 0 : index
    %1 = vector.load %arg2[%c0_1, %c0_2] : memref<1x16xf32, #tpu.memory_space<vmem>>, vector<1x16xf32>
    %2 = vector.broadcast %1 : vector<1x16xf32> to vector<128x16xf32>
    %3 = arith.mulf %0, %2 : vector<128x16xf32>
    %c0_3 = arith.constant 0 : index
    %c0_4 = arith.constant 0 : index
    %4 = vector.load %arg3[%c0_3, %c0_4] : memref<1x16xf32, #tpu.memory_space<vmem>>, vector<1x16xf32>
    %5 = vector.broadcast %4 : vector<1x16xf32> to vector<128x16xf32>
    %6 = arith.addf %3, %5 : vector<128x16xf32>
    %cst = arith.constant 0.000000e+00 : f32
    %7 = vector.broadcast %cst : f32 to vector<128x16xf32>
    %8 = arith.maximumf %6, %7 : vector<128x16xf32>
    %c0_5 = arith.constant 0 : index
    %c0_6 = arith.constant 0 : index
    %9 = vector.load %arg4[%c0_5, %c0_6] : memref<128x16xf32, #tpu.memory_space<vmem>>, vector<128x16xf32>
    tpu.vector_store %arg4[%c0_5, %c0_6], %8 {strides = array<i32>} : memref<128x16xf32, #tpu.memory_space<vmem>>, vector<128x16xf32>,
    return
  }
  func.func @transform_0(%arg0: i32) -> (i32, i32) {
    %c0_i32 = arith.constant 0 : i32
    %c0_i32_0 = arith.constant 0 : i32
    return %arg0, %c0_i32 : i32, i32
  }
  func.func @transform_1(%arg0: i32) -> (i32, i32) {
    %c0_i32 = arith.constant 0 : i32
    %c0_i32_0 = arith.constant 0 : i32
    %c0_i32_1 = arith.constant 0 : i32
    return %c0_i32, %c0_i32_0 : i32, i32
  }
  func.func @transform_2(%arg0: i32) -> (i32, i32) {
    %c0_i32 = arith.constant 0 : i32
    %c0_i32_0 = arith.constant 0 : i32
    %c0_i32_1 = arith.constant 0 : i32
    return %c0_i32, %c0_i32_0 : i32, i32
  }
  func.func @transform_3(%arg0: i32) -> (i32, i32) {
    %c0_i32 = arith.constant 0 : i32
    %c0_i32_0 = arith.constant 0 : i32
    return %arg0, %c0_i32 : i32, i32
  }
}

module attributes {stable_mosaic.version = 11 : i64} {
  func.func @conv_cat_kernel(%arg0: i32, %arg1: memref<128x400xf32, #tpu.memory_space<vmem>>, %arg2: memref<400x16xf32, #tpu.memory_space<vmem>>, %arg3: memref<1x16xf32, #tpu.memory_space<vmem>>, %arg4: memref<128x16xf32, #tpu.memory_space<vmem>>) attributes {dimension_semantics = [#tpu.dimension_semantics<parallel>], iteration_bounds = array<i64: 1>, scalar_prefetch = 0 : i64, scratch_operands = 0 : i64, tpu.core_type = #tpu.core_type<tc>, window_params = [{transform_indices = @transform_0, window_bounds = array<i64: 128, 400>}, {pipeline_mode = #tpu.pipeline_mode<synchronous>, transform_indices = @transform_1, window_bounds = array<i64: 400, 16>}, {pipeline_mode = #tpu.pipeline_mode<synchronous>, transform_indices = @transform_2, window_bounds = array<i64: 1, 16>}, {transform_indices = @transform_3, window_bounds = array<i64: 128, 16>}]} {
    %c0 = arith.constant 0 : index
    %c0_0 = arith.constant 0 : index
    %0 = vector.load %arg1[%c0, %c0_0] : memref<128x400xf32, #tpu.memory_space<vmem>>, vector<128x400xf32>
    %c0_1 = arith.constant 0 : index
    %c0_2 = arith.constant 0 : index
    %1 = vector.load %arg2[%c0_1, %c0_2] : memref<400x16xf32, #tpu.memory_space<vmem>>, vector<400x16xf32>
    %cst = arith.constant dense<0.000000e+00> : vector<128x16xf32>
    %2 = tpu.matmul %0, %1, %cst {dimension_numbers = #tpu.dot_dimension_numbers<[1], [0], [0], [1], [0, 0, 1, 1], [], []>} : vector<128x400xf32>, vector<400x16xf32>, vector<128x16xf32> -> vector<128x16xf32>
    %c0_3 = arith.constant 0 : index
    %c0_4 = arith.constant 0 : index
    %3 = vector.load %arg3[%c0_3, %c0_4] : memref<1x16xf32, #tpu.memory_space<vmem>>, vector<1x16xf32>
    %4 = vector.broadcast %3 : vector<1x16xf32> to vector<128x16xf32>
    %5 = arith.addf %2, %4 : vector<128x16xf32>
    %c0_5 = arith.constant 0 : index
    %c0_6 = arith.constant 0 : index
    %6 = vector.load %arg4[%c0_5, %c0_6] : memref<128x16xf32, #tpu.memory_space<vmem>>, vector<128x16xf32>
    tpu.vector_store %arg4[%c0_5, %c0_6], %5 {strides = array<i32>} : memref<128x16xf32, #tpu.memory_space<vmem>>, vector<128x16xf32>,
    return
  }
  func.func @transform_0(%arg0: i32) -> (i32, i32) {
    %c0_i32 = arith.constant 0 : i32
    %c0_i32_0 = arith.constant 0 : i32
    return %arg0, %c0_i32 : i32, i32
  }
  func.func @transform_1(%arg0: i32) -> (i32, i32) {
    %c0_i32 = arith.constant 0 : i32
    %c0_i32_0 = arith.constant 0 : i32
    %c0_i32_1 = arith.constant 0 : i32
    return %c0_i32, %c0_i32_0 : i32, i32
  }
  func.func @transform_2(%arg0: i32) -> (i32, i32) {
    %c0_i32 = arith.constant 0 : i32
    %c0_i32_0 = arith.constant 0 : i32
    %c0_i32_1 = arith.constant 0 : i32
    return %c0_i32, %c0_i32_0 : i32, i32
  }
  func.func @transform_3(%arg0: i32) -> (i32, i32) {
    %c0_i32 = arith.constant 0 : i32
    %c0_i32_0 = arith.constant 0 : i32
    return %arg0, %c0_i32 : i32, i32
  }
}

module attributes {stable_mosaic.version = 11 : i64} {
  func.func @bn_relu_kernel(%arg0: i32, %arg1: memref<128x16xf32, #tpu.memory_space<vmem>>, %arg2: memref<1x16xf32, #tpu.memory_space<vmem>>, %arg3: memref<1x16xf32, #tpu.memory_space<vmem>>, %arg4: memref<128x16xf32, #tpu.memory_space<vmem>>) attributes {dimension_semantics = [#tpu.dimension_semantics<parallel>], iteration_bounds = array<i64: 1>, scalar_prefetch = 0 : i64, scratch_operands = 0 : i64, tpu.core_type = #tpu.core_type<tc>, window_params = [{transform_indices = @transform_0, window_bounds = array<i64: 128, 16>}, {pipeline_mode = #tpu.pipeline_mode<synchronous>, transform_indices = @transform_1, window_bounds = array<i64: 1, 16>}, {pipeline_mode = #tpu.pipeline_mode<synchronous>, transform_indices = @transform_2, window_bounds = array<i64: 1, 16>}, {transform_indices = @transform_3, window_bounds = array<i64: 128, 16>}]} {
    %c0 = arith.constant 0 : index
    %c0_0 = arith.constant 0 : index
    %0 = vector.load %arg1[%c0, %c0_0] : memref<128x16xf32, #tpu.memory_space<vmem>>, vector<128x16xf32>
    %c0_1 = arith.constant 0 : index
    %c0_2 = arith.constant 0 : index
    %1 = vector.load %arg2[%c0_1, %c0_2] : memref<1x16xf32, #tpu.memory_space<vmem>>, vector<1x16xf32>
    %2 = vector.broadcast %1 : vector<1x16xf32> to vector<128x16xf32>
    %3 = arith.mulf %0, %2 : vector<128x16xf32>
    %c0_3 = arith.constant 0 : index
    %c0_4 = arith.constant 0 : index
    %4 = vector.load %arg3[%c0_3, %c0_4] : memref<1x16xf32, #tpu.memory_space<vmem>>, vector<1x16xf32>
    %5 = vector.broadcast %4 : vector<1x16xf32> to vector<128x16xf32>
    %6 = arith.addf %3, %5 : vector<128x16xf32>
    %cst = arith.constant 0.000000e+00 : f32
    %7 = vector.broadcast %cst : f32 to vector<128x16xf32>
    %8 = arith.maximumf %6, %7 : vector<128x16xf32>
    %c0_5 = arith.constant 0 : index
    %c0_6 = arith.constant 0 : index
    %9 = vector.load %arg4[%c0_5, %c0_6] : memref<128x16xf32, #tpu.memory_space<vmem>>, vector<128x16xf32>
    tpu.vector_store %arg4[%c0_5, %c0_6], %8 {strides = array<i32>} : memref<128x16xf32, #tpu.memory_space<vmem>>, vector<128x16xf32>,
    return
  }
  func.func @transform_0(%arg0: i32) -> (i32, i32) {
    %c0_i32 = arith.constant 0 : i32
    %c0_i32_0 = arith.constant 0 : i32
    return %arg0, %c0_i32 : i32, i32
  }
  func.func @transform_1(%arg0: i32) -> (i32, i32) {
    %c0_i32 = arith.constant 0 : i32
    %c0_i32_0 = arith.constant 0 : i32
    %c0_i32_1 = arith.constant 0 : i32
    return %c0_i32, %c0_i32_0 : i32, i32
  }
  func.func @transform_2(%arg0: i32) -> (i32, i32) {
    %c0_i32 = arith.constant 0 : i32
    %c0_i32_0 = arith.constant 0 : i32
    %c0_i32_1 = arith.constant 0 : i32
    return %c0_i32, %c0_i32_0 : i32, i32
  }
  func.func @transform_3(%arg0: i32) -> (i32, i32) {
    %c0_i32 = arith.constant 0 : i32
    %c0_i32_0 = arith.constant 0 : i32
    return %arg0, %c0_i32 : i32, i32
  }
}

</mosaic_0001>

<llo_original>
// kernel: down_forward.4
$region0: #{down_forward.4}
  #allocation0 [shape = 'u32[]', space=smem, size = 0x4, offset = 0x4, fixed_abs, tag = 'smem constant byte address 0x4 - core index']
  #allocation1 [shape = 'u32[144,128]{1,0:T(1,128)}', space=vmem, size = 0x12000, scoped, tag = 'internal scratch']
  %s0 = inlined_call_operand.vmem [shape: f32[128,100], index: 0, kind: input, shape index: {}]
  %s1 = inlined_call_operand.vmem [shape: f32[100,16], index: 1, kind: input, shape index: {}]
  %s2 = inlined_call_operand.vmem [shape: f32[1,16], index: 2, kind: input, shape index: {}]
  %s3 = inlined_call_operand.vmem [shape: f32[128,16], index: 3, kind: output, shape index: {}]
  %s4 = sld [smem:[#allocation0]]
  $region22: #{down_forward.4} parent=0
    _
  %s6 = ssub.s32 1, %s4
  %s7 = scalar_select 0, %s6, %s4
  // Predicated region
  $region2: #{down_forward.4} parent=0 // pred_check
    _
  $region3: #{down_forward.4} parent=0 // pred_check_branch
    %9 = sbr.rel (0) target = $region5
  $region4: #{down_forward.4} parent=0 // pred_region
    _
  $region5: #{down_forward.4} parent=0 // pred_fallthru
    _
  // Predicated region
  $region6: #{down_forward.4} parent=0 // pred_check
    _
  $region7: #{down_forward.4} parent=0 // pred_check_branch
    %11 = sbr.rel (0) target = $region9
  $region8: #{down_forward.4} parent=0 // pred_region
    _
  $region9: #{down_forward.4} parent=0 // pred_fallthru
    _
  // Predicated region
  $region10: #{down_forward.4} parent=0 // pred_check
    _
  $region11: #{down_forward.4} parent=0 // pred_check_branch
    %13 = sbr.rel (0) target = $region13
  $region12: #{down_forward.4} parent=0 // pred_region
    _
  $region13: #{down_forward.4} parent=0 // pred_fallthru
    _
  %v14 = vld [vmem:[%s0] sm:$0xff]
  %v15 = vld [vmem:[%s0 + $0x8] sm:$0xff]
  %v16 = vld [vmem:[%s0 + $0x10] sm:$0xff]
  %v17 = vld [vmem:[%s0 + $0x18] sm:$0xff]
  %v18 = vld [vmem:[%s0 + $0x20] sm:$0xff]
  %v19 = vld [vmem:[%s0 + $0x28] sm:$0xff]
  %v20 = vld [vmem:[%s0 + $0x30] sm:$0xff]
  %v21 = vld [vmem:[%s0 + $0x38] sm:$0xff]
  %v22 = vld [vmem:[%s0 + $0x40] sm:$0xff]
  %v23 = vld [vmem:[%s0 + $0x48] sm:$0xff]
  %v24 = vld [vmem:[%s0 + $0x50] sm:$0xff]
  %v25 = vld [vmem:[%s0 + $0x58] sm:$0xff]
  %v26 = vld [vmem:[%s0 + $0x60] sm:$0xff]
  %v27 = vld [vmem:[%s0 + $0x68] sm:$0xff]
  %v28 = vld [vmem:[%s0 + $0x70] sm:$0xff]
  %v29 = vld [vmem:[%s0 + $0x78] sm:$0xff]
  %v30 = vld [vmem:[%s1] sm:$0xff]
  %v31 = vld [vmem:[%s1 + $0x8] sm:$0xff]
  %v32 = vld [vmem:[%s1 + $0x10] sm:$0xff]
  %v33 = vld [vmem:[%s1 + $0x18] sm:$0xff]
  %v34 = vld [vmem:[%s1 + $0x20] sm:$0xff]
  %v35 = vld [vmem:[%s1 + $0x28] sm:$0xff]
  %v36 = vld [vmem:[%s1 + $0x30] sm:$0xff]
  %v37 = vld [vmem:[%s1 + $0x38] sm:$0xff]
  %v38 = vld [vmem:[%s1 + $0x40] sm:$0xff]
  %v39 = vld [vmem:[%s1 + $0x48] sm:$0xff]
  %v40 = vld [vmem:[%s1 + $0x50] sm:$0xff]
  %v41 = vld [vmem:[%s1 + $0x58] sm:$0xff]
  %v42 = vld [vmem:[%s1 + $0x60] sm:$0xf]
  %v43 = vld [vmem:[%s2] sm:$0x1]
  %v45 = vlaneseq
  %v46 = vshrl.u32 %v45, 7
  %v47 = vsub.s32 0, %v46
  %v48 = vrot.slane %v43, %v47
  %vm50 = vcmask 818176
  %v52 = vsel %vm50, %v14, 0
  %v55 = vsel %vm50, %v15, 0
  %v58 = vsel %vm50, %v16, 0
  %v61 = vsel %vm50, %v17, 0
  %v64 = vsel %vm50, %v18, 0
  %v67 = vsel %vm50, %v19, 0
  %v70 = vsel %vm50, %v20, 0
  %v73 = vsel %vm50, %v21, 0
  %v76 = vsel %vm50, %v22, 0
  %v79 = vsel %vm50, %v23, 0
  %v82 = vsel %vm50, %v24, 0
  %v85 = vsel %vm50, %v25, 0
  %v88 = vsel %vm50, %v26, 0
  %v91 = vsel %vm50, %v27, 0
  %v94 = vsel %vm50, %v28, 0
  %v97 = vsel %vm50, %v29, 0
  %vm99 = vcmask 1043456
  %v101 = vsel %vm99, %v42, 0
  %103 = vmatprep.subr.mxu0 0.0
  %104 = vmatpush1.msra.mxu0 %v30
  %105 = vmatprep.subr.mxu0 0.0
  %106 = vmatpush1.msra.mxu0 %v31
  %107 = vmatprep.subr.mxu0 0.0
  %108 = vmatpush1.msra.mxu0 %v32
  %109 = vmatprep.subr.mxu0 0.0
  %110 = vmatpush1.msra.mxu0 %v33
  %111 = vmatprep.subr.mxu0 0.0
  %112 = vmatpush1.msra.mxu0 %v34
  %113 = vmatprep.subr.mxu0 0.0
  %114 = vmatpush1.msra.mxu0 %v35
  %115 = vmatprep.subr.mxu0 0.0
  %116 = vmatpush1.msra.mxu0 %v36
  %117 = vmatprep.subr.mxu0 0.0
  %118 = vmatpush1.msra.mxu0 %v37
  %119 = vmatprep.subr.mxu0 0.0
  %120 = vmatpush1.msra.mxu0 %v38
  %121 = vmatprep.subr.mxu0 0.0
  %122 = vmatpush1.msra.mxu0 %v39
  %123 = vmatprep.subr.mxu0 0.0
  %124 = vmatpush1.msra.mxu0 %v40
  %125 = vmatprep.subr.mxu0 0.0
  %126 = vmatpush1.msra.mxu0 %v41
  %127 = vmatprep.subr.mxu0 0.0
  %128 = vmatpush1.msra.mxu0 %v101
  %129 = vmatprep.subr.mxu0 0.0
  %130 = vmatpush1.msra.mxu0 0.0
  %131 = vmatprep.subr.mxu0 0.0
  %132 = vmatpush1.msra.mxu0 0.0
  %133 = vmatprep.subr.mxu0 0.0
  %134 = vmatpush1.msra.mxu0 0.0
  %135 = vmatprep.subr.mxu0 0.0
  %136 = vmatpush1.msra.mxu0 0.0
  %137 = vmatprep.subr.mxu0 0.0
  %138 = vmatpush1.msra.mxu0 0.0
  %139 = vmatprep.subr.mxu0 0.0
  %140 = vmatpush1.msra.mxu0 0.0
  %141 = vmatprep.subr.mxu0 0.0
  %142 = vmatpush1.msra.mxu0 0.0
  %143 = vmatprep.subr.mxu0 0.0
  %144 = vmatpush1.msra.mxu0 0.0
  %145 = vmatprep.subr.mxu0 0.0
  %146 = vmatpush1.msra.mxu0 0.0
  %147 = vmatprep.subr.mxu0 0.0
  %148 = vmatpush1.msra.mxu0 0.0
  %149 = vmatprep.subr.mxu0 0.0
  %150 = vmatpush1.msra.mxu0 0.0
  %151 = vmatprep.subr.mxu0 0.0
  %152 = vmatpush1.msra.mxu0 0.0
  %153 = vmatprep.subr.mxu0 0.0
  %154 = vmatpush1.msra.mxu0 0.0
  %155 = vmatprep.subr.mxu0 0.0
  %156 = vmatpush1.msra.mxu0 0.0
  %157 = vmatprep.subr.mxu0 0.0
  %158 = vmatpush1.msra.mxu0 0.0
  %159 = vmatprep.subr.mxu0 0.0
  %160 = vmatpush1.msra.mxu0 0.0
  %161 = vmatprep.subr.mxu0 0.0
  %162 = vmatpush1.msra.mxu0 0.0
  %163 = vmatprep.subr.mxu0 0.0
  %164 = vmatpush1.msra.mxu0 0.0
  %165 = vmatprep.subr.mxu0 0.0
  %166 = vmatpush1.msra.mxu0 0.0
  %167 = vmatprep.mubr.f32.mxu0 0.0
  %168 = vmatmul.mubr.f32.gmra.mrb[0].mxu0 %v52
  %v169 = vpop.f32.mrb[0].mxu0
  %v170 = vadd.f32 %v48, %v169
  %v171 = vpop.f32.mrb[0].mxu0
  %172 = vmatprep.mubr.f32.mxu0 0.0
  %173 = vmatmul.mubr.f32.gmra.mrb[0].mxu0 %v55
  %v174 = vpop.f32.mrb[0].mxu0
  %v175 = vadd.f32 %v48, %v174
  %v176 = vpop.f32.mrb[0].mxu0
  %177 = vmatprep.mubr.f32.mxu0 0.0
  %178 = vmatmul.mubr.f32.gmra.mrb[0].mxu0 %v58
  %v179 = vpop.f32.mrb[0].mxu0
  %v180 = vadd.f32 %v48, %v179
  %v181 = vpop.f32.mrb[0].mxu0
  %182 = vmatprep.mubr.f32.mxu0 0.0
  %183 = vmatmul.mubr.f32.gmra.mrb[0].mxu0 %v61
  %v184 = vpop.f32.mrb[0].mxu0
  %v185 = vadd.f32 %v48, %v184
  %v186 = vpop.f32.mrb[0].mxu0
  %187 = vmatprep.mubr.f32.mxu0 0.0
  %188 = vmatmul.mubr.f32.gmra.mrb[0].mxu0 %v64
  %v189 = vpop.f32.mrb[0].mxu0
  %v190 = vadd.f32 %v48, %v189
  %v191 = vpop.f32.mrb[0].mxu0
  %192 = vmatprep.mubr.f32.mxu0 0.0
  %193 = vmatmul.mubr.f32.gmra.mrb[0].mxu0 %v67
  %v194 = vpop.f32.mrb[0].mxu0
  %v195 = vadd.f32 %v48, %v194
  %v196 = vpop.f32.mrb[0].mxu0
  %197 = vmatprep.mubr.f32.mxu0 0.0
  %198 = vmatmul.mubr.f32.gmra.mrb[0].mxu0 %v70
  %v199 = vpop.f32.mrb[0].mxu0
  %v200 = vadd.f32 %v48, %v199
  %v201 = vpop.f32.mrb[0].mxu0
  %202 = vmatprep.mubr.f32.mxu0 0.0
  %203 = vmatmul.mubr.f32.gmra.mrb[0].mxu0 %v73
  %v204 = vpop.f32.mrb[0].mxu0
  %v205 = vadd.f32 %v48, %v204
  %v206 = vpop.f32.mrb[0].mxu0
  %207 = vmatprep.mubr.f32.mxu0 0.0
  %208 = vmatmul.mubr.f32.gmra.mrb[0].mxu0 %v76
  %v209 = vpop.f32.mrb[0].mxu0
  %v210 = vadd.f32 %v48, %v209
  %v211 = vpop.f32.mrb[0].mxu0
  %212 = vmatprep.mubr.f32.mxu0 0.0
  %213 = vmatmul.mubr.f32.gmra.mrb[0].mxu0 %v79
  %v214 = vpop.f32.mrb[0].mxu0
  %v215 = vadd.f32 %v48, %v214
  %v216 = vpop.f32.mrb[0].mxu0
  %217 = vmatprep.mubr.f32.mxu0 0.0
  %218 = vmatmul.mubr.f32.gmra.mrb[0].mxu0 %v82
  %v219 = vpop.f32.mrb[0].mxu0
  %v220 = vadd.f32 %v48, %v219
  %v221 = vpop.f32.mrb[0].mxu0
  %222 = vmatprep.mubr.f32.mxu0 0.0
  %223 = vmatmul.mubr.f32.gmra.mrb[0].mxu0 %v85
  %v224 = vpop.f32.mrb[0].mxu0
  %v225 = vadd.f32 %v48, %v224
  %v226 = vpop.f32.mrb[0].mxu0
  %227 = vmatprep.mubr.f32.mxu0 0.0
  %228 = vmatmul.mubr.f32.gmra.mrb[0].mxu0 %v88
  %v229 = vpop.f32.mrb[0].mxu0
  %v230 = vadd.f32 %v48, %v229
  %v231 = vpop.f32.mrb[0].mxu0
  %232 = vmatprep.mubr.f32.mxu0 0.0
  %233 = vmatmul.mubr.f32.gmra.mrb[0].mxu0 %v91
  %v234 = vpop.f32.mrb[0].mxu0
  %v235 = vadd.f32 %v48, %v234
  %v236 = vpop.f32.mrb[0].mxu0
  %237 = vmatprep.mubr.f32.mxu0 0.0
  %238 = vmatmul.mubr.f32.gmra.mrb[0].mxu0 %v94
  %v239 = vpop.f32.mrb[0].mxu0
  %v240 = vadd.f32 %v48, %v239
  %v241 = vpop.f32.mrb[0].mxu0
  %242 = vmatprep.mubr.f32.mxu0 0.0
  %243 = vmatmul.mubr.f32.gmra.mrb[0].mxu0 %v97
  %v244 = vpop.f32.mrb[0].mxu0
  %v245 = vadd.f32 %v48, %v244
  %v246 = vpop.f32.mrb[0].mxu0
  %247 = vdwg.mxu0
  %vm248 = vcmask 130048
  %249 = vst.msk [vmem:[%s3] sm:$0xff] %vm248, %v170
  %250 = vst.msk [vmem:[%s3 + $0x8] sm:$0xff] %vm248, %v175
  %251 = vst.msk [vmem:[%s3 + $0x10] sm:$0xff] %vm248, %v180
  %252 = vst.msk [vmem:[%s3 + $0x18] sm:$0xff] %vm248, %v185
  %253 = vst.msk [vmem:[%s3 + $0x20] sm:$0xff] %vm248, %v190
  %254 = vst.msk [vmem:[%s3 + $0x28] sm:$0xff] %vm248, %v195
  %255 = vst.msk [vmem:[%s3 + $0x30] sm:$0xff] %vm248, %v200
  %256 = vst.msk [vmem:[%s3 + $0x38] sm:$0xff] %vm248, %v205
  %257 = vst.msk [vmem:[%s3 + $0x40] sm:$0xff] %vm248, %v210
  %258 = vst.msk [vmem:[%s3 + $0x48] sm:$0xff] %vm248, %v215
  %259 = vst.msk [vmem:[%s3 + $0x50] sm:$0xff] %vm248, %v220
  %260 = vst.msk [vmem:[%s3 + $0x58] sm:$0xff] %vm248, %v225
  %261 = vst.msk [vmem:[%s3 + $0x60] sm:$0xff] %vm248, %v230
  %262 = vst.msk [vmem:[%s3 + $0x68] sm:$0xff] %vm248, %v235
  %263 = vst.msk [vmem:[%s3 + $0x70] sm:$0xff] %vm248, %v240
  %264 = vst.msk [vmem:[%s3 + $0x78] sm:$0xff] %vm248, %v245
  // Predicated region
  $region14: #{down_forward.4} parent=0 // pred_check
    _
  $region15: #{down_forward.4} parent=0 // pred_check_branch
    %266 = sbr.rel (0) target = $region17
  $region16: #{down_forward.4} parent=0 // pred_region
    _
  $region17: #{down_forward.4} parent=0 // pred_fallthru
    _
  // Predicated region
  $region18: #{down_forward.4} parent=0 // pred_check
    _
  $region19: #{down_forward.4} parent=0 // pred_check_branch
    %268 = sbr.rel (0) target = $region21
  $region20: #{down_forward.4} parent=0 // pred_region
    _
  $region21: #{down_forward.4} parent=0 // pred_fallthru
    _

// kernel: down_forward.5
$region0: #{down_forward.5}
  #allocation0 [shape = 'u32[]', space=smem, size = 0x4, offset = 0x4, fixed_abs, tag = 'smem constant byte address 0x4 - core index']
  #allocation1 [shape = 'u32[144,128]{1,0:T(1,128)}', space=vmem, size = 0x12000, scoped, tag = 'internal scratch']
  %s0 = inlined_call_operand.vmem [shape: f32[128,16], index: 0, kind: input, shape index: {}]
  %s1 = inlined_call_operand.vmem [shape: f32[1,16], index: 1, kind: input, shape index: {}]
  %s2 = inlined_call_operand.vmem [shape: f32[1,16], index: 2, kind: input, shape index: {}]
  %s3 = inlined_call_operand.vmem [shape: f32[128,16], index: 3, kind: output, shape index: {}]
  %s4 = sld [smem:[#allocation0]]
  $region22: #{down_forward.5} parent=0
    _
  %s6 = ssub.s32 1, %s4
  %s7 = scalar_select 0, %s6, %s4
  // Predicated region
  $region2: #{down_forward.5} parent=0 // pred_check
    _
  $region3: #{down_forward.5} parent=0 // pred_check_branch
    %9 = sbr.rel (0) target = $region5
  $region4: #{down_forward.5} parent=0 // pred_region
    _
  $region5: #{down_forward.5} parent=0 // pred_fallthru
    _
  // Predicated region
  $region6: #{down_forward.5} parent=0 // pred_check
    _
  $region7: #{down_forward.5} parent=0 // pred_check_branch
    %11 = sbr.rel (0) target = $region9
  $region8: #{down_forward.5} parent=0 // pred_region
    _
  $region9: #{down_forward.5} parent=0 // pred_fallthru
    _
  // Predicated region
  $region10: #{down_forward.5} parent=0 // pred_check
    _
  $region11: #{down_forward.5} parent=0 // pred_check_branch
    %13 = sbr.rel (0) target = $region13
  $region12: #{down_forward.5} parent=0 // pred_region
    _
  $region13: #{down_forward.5} parent=0 // pred_fallthru
    _
  %v14 = vld [vmem:[%s0] sm:$0xff]
  %v15 = vld [vmem:[%s0 + $0x8] sm:$0xff]
  %v16 = vld [vmem:[%s0 + $0x10] sm:$0xff]
  %v17 = vld [vmem:[%s0 + $0x18] sm:$0xff]
  %v18 = vld [vmem:[%s0 + $0x20] sm:$0xff]
  %v19 = vld [vmem:[%s0 + $0x28] sm:$0xff]
  %v20 = vld [vmem:[%s0 + $0x30] sm:$0xff]
  %v21 = vld [vmem:[%s0 + $0x38] sm:$0xff]
  %v22 = vld [vmem:[%s0 + $0x40] sm:$0xff]
  %v23 = vld [vmem:[%s0 + $0x48] sm:$0xff]
  %v24 = vld [vmem:[%s0 + $0x50] sm:$0xff]
  %v25 = vld [vmem:[%s0 + $0x58] sm:$0xff]
  %v26 = vld [vmem:[%s0 + $0x60] sm:$0xff]
  %v27 = vld [vmem:[%s0 + $0x68] sm:$0xff]
  %v28 = vld [vmem:[%s0 + $0x70] sm:$0xff]
  %v29 = vld [vmem:[%s0 + $0x78] sm:$0xff]
  %v30 = vld [vmem:[%s1] sm:$0x1]
  %v32 = vlaneseq
  %v33 = vshrl.u32 %v32, 7
  %v34 = vsub.s32 0, %v33
  %v35 = vrot.slane %v30, %v34
  %v37 = vmul.f32 %v14, %v35
  %v38 = vmul.f32 %v15, %v35
  %v39 = vmul.f32 %v16, %v35
  %v40 = vmul.f32 %v17, %v35
  %v41 = vmul.f32 %v18, %v35
  %v42 = vmul.f32 %v19, %v35
  %v43 = vmul.f32 %v20, %v35
  %v44 = vmul.f32 %v21, %v35
  %v45 = vmul.f32 %v22, %v35
  %v46 = vmul.f32 %v23, %v35
  %v47 = vmul.f32 %v24, %v35
  %v48 = vmul.f32 %v25, %v35
  %v49 = vmul.f32 %v26, %v35
  %v50 = vmul.f32 %v27, %v35
  %v51 = vmul.f32 %v28, %v35
  %v52 = vmul.f32 %v29, %v35
  %v53 = vld [vmem:[%s2] sm:$0x1]
  %v55 = vlaneseq
  %v56 = vshrl.u32 %v55, 7
  %v57 = vsub.s32 0, %v56
  %v58 = vrot.slane %v53, %v57
  %v60 = vadd.f32 %v37, %v58
  %v61 = vadd.f32 %v38, %v58
  %v62 = vadd.f32 %v39, %v58
  %v63 = vadd.f32 %v40, %v58
  %v64 = vadd.f32 %v41, %v58
  %v65 = vadd.f32 %v42, %v58
  %v66 = vadd.f32 %v43, %v58
  %v67 = vadd.f32 %v44, %v58
  %v68 = vadd.f32 %v45, %v58
  %v69 = vadd.f32 %v46, %v58
  %v70 = vadd.f32 %v47, %v58
  %v71 = vadd.f32 %v48, %v58
  %v72 = vadd.f32 %v49, %v58
  %v73 = vadd.f32 %v50, %v58
  %v74 = vadd.f32 %v51, %v58
  %v75 = vadd.f32 %v52, %v58
  %v76 = vmax.f32 %v60, 0.0
  %v77 = vmax.f32 %v61, 0.0
  %v78 = vmax.f32 %v62, 0.0
  %v79 = vmax.f32 %v63, 0.0
  %v80 = vmax.f32 %v64, 0.0
  %v81 = vmax.f32 %v65, 0.0
  %v82 = vmax.f32 %v66, 0.0
  %v83 = vmax.f32 %v67, 0.0
  %v84 = vmax.f32 %v68, 0.0
  %v85 = vmax.f32 %v69, 0.0
  %v86 = vmax.f32 %v70, 0.0
  %v87 = vmax.f32 %v71, 0.0
  %v88 = vmax.f32 %v72, 0.0
  %v89 = vmax.f32 %v73, 0.0
  %v90 = vmax.f32 %v74, 0.0
  %v91 = vmax.f32 %v75, 0.0
  %vm92 = vcmask 130048
  %93 = vst.msk [vmem:[%s3] sm:$0xff] %vm92, %v76
  %94 = vst.msk [vmem:[%s3 + $0x8] sm:$0xff] %vm92, %v77
  %95 = vst.msk [vmem:[%s3 + $0x10] sm:$0xff] %vm92, %v78
  %96 = vst.msk [vmem:[%s3 + $0x18] sm:$0xff] %vm92, %v79
  %97 = vst.msk [vmem:[%s3 + $0x20] sm:$0xff] %vm92, %v80
  %98 = vst.msk [vmem:[%s3 + $0x28] sm:$0xff] %vm92, %v81
  %99 = vst.msk [vmem:[%s3 + $0x30] sm:$0xff] %vm92, %v82
  %100 = vst.msk [vmem:[%s3 + $0x38] sm:$0xff] %vm92, %v83
  %101 = vst.msk [vmem:[%s3 + $0x40] sm:$0xff] %vm92, %v84
  %102 = vst.msk [vmem:[%s3 + $0x48] sm:$0xff] %vm92, %v85
  %103 = vst.msk [vmem:[%s3 + $0x50] sm:$0xff] %vm92, %v86
  %104 = vst.msk [vmem:[%s3 + $0x58] sm:$0xff] %vm92, %v87
  %105 = vst.msk [vmem:[%s3 + $0x60] sm:$0xff] %vm92, %v88
  %106 = vst.msk [vmem:[%s3 + $0x68] sm:$0xff] %vm92, %v89
  %107 = vst.msk [vmem:[%s3 + $0x70] sm:$0xff] %vm92, %v90
  %108 = vst.msk [vmem:[%s3 + $0x78] sm:$0xff] %vm92, %v91
  // Predicated region
  $region14: #{down_forward.5} parent=0 // pred_check
    _
  $region15: #{down_forward.5} parent=0 // pred_check_branch
    %110 = sbr.rel (0) target = $region17
  $region16: #{down_forward.5} parent=0 // pred_region
    _
  $region17: #{down_forward.5} parent=0 // pred_fallthru
    _
  // Predicated region
  $region18: #{down_forward.5} parent=0 // pred_check
    _
  $region19: #{down_forward.5} parent=0 // pred_check_branch
    %112 = sbr.rel (0) target = $region21
  $region20: #{down_forward.5} parent=0 // pred_region
    _
  $region21: #{down_forward.5} parent=0 // pred_fallthru
    _

// kernel: down_forward.7
$region0: #{down_forward.7}
  #allocation0 [shape = 'u32[]', space=smem, size = 0x4, offset = 0x4, fixed_abs, tag = 'smem constant byte address 0x4 - core index']
  #allocation1 [shape = 'u32[144,128]{1,0:T(1,128)}', space=vmem, size = 0x12000, scoped, tag = 'internal scratch']
  %s0 = inlined_call_operand.vmem [shape: f32[128,16], index: 0, kind: input, shape index: {}]
  %s1 = inlined_call_operand.vmem [shape: f32[1,16], index: 1, kind: input, shape index: {}]
  %s2 = inlined_call_operand.vmem [shape: f32[1,16], index: 2, kind: input, shape index: {}]
  %s3 = inlined_call_operand.hbm [shape: f32[128,16], index: 3, kind: output, shape index: {}]
  %s4 = sld [smem:[#allocation0]]
  $region22: #{down_forward.7} parent=0
    _
  %s6 = ssub.s32 1, %s4
  %s7 = scalar_select 0, %s6, %s4
  $region1: #{down_forward.7} parent=0
    #allocation2 [shape = 'u8[65536]{0}', space=vmem, size = 0x10000, scoped, tag = 'output window, operand 0, single buffered']
    #allocation3 [shape = 's32[1]{0}', space=sflag, size = 0x4, scoped, tag = 'scoped memory for down_forward.7']
    %8 = vsyncpa [#allocation3], 0
    // Predicated region
    $region2: #{down_forward.7} parent=1 // pred_check
      _
    $region3: #{down_forward.7} parent=1 // pred_check_branch
      %10 = sbr.rel (0) target = $region5
    $region4: #{down_forward.7} parent=1 // pred_region
      _
    $region5: #{down_forward.7} parent=1 // pred_fallthru
      _
    // Predicated region
    $region6: #{down_forward.7} parent=1 // pred_check
      _
    $region7: #{down_forward.7} parent=1 // pred_check_branch
      %12 = sbr.rel (0) target = $region9
    $region8: #{down_forward.7} parent=1 // pred_region
      _
    $region9: #{down_forward.7} parent=1 // pred_fallthru
      _
    // Predicated region
    $region10: #{down_forward.7} parent=1 // pred_check
      _
    $region11: #{down_forward.7} parent=1 // pred_check_branch
      %14 = sbr.rel (0) target = $region13
    $region12: #{down_forward.7} parent=1 // pred_region
      _
    $region13: #{down_forward.7} parent=1 // pred_fallthru
      _
    %v15 = vld [vmem:[%s0] sm:$0xff]
    %v16 = vld [vmem:[%s0 + $0x8] sm:$0xff]
    %v17 = vld [vmem:[%s0 + $0x10] sm:$0xff]
    %v18 = vld [vmem:[%s0 + $0x18] sm:$0xff]
    %v19 = vld [vmem:[%s0 + $0x20] sm:$0xff]
    %v20 = vld [vmem:[%s0 + $0x28] sm:$0xff]
    %v21 = vld [vmem:[%s0 + $0x30] sm:$0xff]
    %v22 = vld [vmem:[%s0 + $0x38] sm:$0xff]
    %v23 = vld [vmem:[%s0 + $0x40] sm:$0xff]
    %v24 = vld [vmem:[%s0 + $0x48] sm:$0xff]
    %v25 = vld [vmem:[%s0 + $0x50] sm:$0xff]
    %v26 = vld [vmem:[%s0 + $0x58] sm:$0xff]
    %v27 = vld [vmem:[%s0 + $0x60] sm:$0xff]
    %v28 = vld [vmem:[%s0 + $0x68] sm:$0xff]
    %v29 = vld [vmem:[%s0 + $0x70] sm:$0xff]
    %v30 = vld [vmem:[%s0 + $0x78] sm:$0xff]
    %v31 = vld [vmem:[%s1] sm:$0x1]
    %v33 = vlaneseq
    %v34 = vshrl.u32 %v33, 7
    %v35 = vsub.s32 0, %v34
    %v36 = vrot.slane %v31, %v35
    %v38 = vmul.f32 %v15, %v36
    %v39 = vmul.f32 %v16, %v36
    %v40 = vmul.f32 %v17, %v36
    %v41 = vmul.f32 %v18, %v36
    %v42 = vmul.f32 %v19, %v36
    %v43 = vmul.f32 %v20, %v36
    %v44 = vmul.f32 %v21, %v36
    %v45 = vmul.f32 %v22, %v36
    %v46 = vmul.f32 %v23, %v36
    %v47 = vmul.f32 %v24, %v36
    %v48 = vmul.f32 %v25, %v36
    %v49 = vmul.f32 %v26, %v36
    %v50 = vmul.f32 %v27, %v36
    %v51 = vmul.f32 %v28, %v36
    %v52 = vmul.f32 %v29, %v36
    %v53 = vmul.f32 %v30, %v36
    %v54 = vld [vmem:[%s2] sm:$0x1]
    %v56 = vlaneseq
    %v57 = vshrl.u32 %v56, 7
    %v58 = vsub.s32 0, %v57
    %v59 = vrot.slane %v54, %v58
    %v61 = vadd.f32 %v38, %v59
    %v62 = vadd.f32 %v39, %v59
    %v63 = vadd.f32 %v40, %v59
    %v64 = vadd.f32 %v41, %v59
    %v65 = vadd.f32 %v42, %v59
    %v66 = vadd.f32 %v43, %v59
    %v67 = vadd.f32 %v44, %v59
    %v68 = vadd.f32 %v45, %v59
    %v69 = vadd.f32 %v46, %v59
    %v70 = vadd.f32 %v47, %v59
    %v71 = vadd.f32 %v48, %v59
    %v72 = vadd.f32 %v49, %v59
    %v73 = vadd.f32 %v50, %v59
    %v74 = vadd.f32 %v51, %v59
    %v75 = vadd.f32 %v52, %v59
    %v76 = vadd.f32 %v53, %v59
    %v77 = vmax.f32 %v61, 0.0
    %v78 = vmax.f32 %v62, 0.0
    %v79 = vmax.f32 %v63, 0.0
    %v80 = vmax.f32 %v64, 0.0
    %v81 = vmax.f32 %v65, 0.0
    %v82 = vmax.f32 %v66, 0.0
    %v83 = vmax.f32 %v67, 0.0
    %v84 = vmax.f32 %v68, 0.0
    %v85 = vmax.f32 %v69, 0.0
    %v86 = vmax.f32 %v70, 0.0
    %v87 = vmax.f32 %v71, 0.0
    %v88 = vmax.f32 %v72, 0.0
    %v89 = vmax.f32 %v73, 0.0
    %v90 = vmax.f32 %v74, 0.0
    %v91 = vmax.f32 %v75, 0.0
    %v92 = vmax.f32 %v76, 0.0
    %vm93 = vcmask 130048
    %94 = vst.msk [vmem:[#allocation2] sm:$0xff] %vm93, %v77
    %95 = vst.msk [vmem:[#allocation2 + $0x8] sm:$0xff] %vm93, %v78
    %96 = vst.msk [vmem:[#allocation2 + $0x10] sm:$0xff] %vm93, %v79
    %97 = vst.msk [vmem:[#allocation2 + $0x18] sm:$0xff] %vm93, %v80
    %98 = vst.msk [vmem:[#allocation2 + $0x20] sm:$0xff] %vm93, %v81
    %99 = vst.msk [vmem:[#allocation2 + $0x28] sm:$0xff] %vm93, %v82
    %100 = vst.msk [vmem:[#allocation2 + $0x30] sm:$0xff] %vm93, %v83
    %101 = vst.msk [vmem:[#allocation2 + $0x38] sm:$0xff] %vm93, %v84
    %102 = vst.msk [vmem:[#allocation2 + $0x40] sm:$0xff] %vm93, %v85
    %103 = vst.msk [vmem:[#allocation2 + $0x48] sm:$0xff] %vm93, %v86
    %104 = vst.msk [vmem:[#allocation2 + $0x50] sm:$0xff] %vm93, %v87
    %105 = vst.msk [vmem:[#allocation2 + $0x58] sm:$0xff] %vm93, %v88
    %106 = vst.msk [vmem:[#allocation2 + $0x60] sm:$0xff] %vm93, %v89
    %107 = vst.msk [vmem:[#allocation2 + $0x68] sm:$0xff] %vm93, %v90
    %108 = vst.msk [vmem:[#allocation2 + $0x70] sm:$0xff] %vm93, %v91
    %109 = vst.msk [vmem:[#allocation2 + $0x78] sm:$0xff] %vm93, %v92
    // Predicated region
    $region14: #{down_forward.7} parent=1 // pred_check
      _
    $region15: #{down_forward.7} parent=1 // pred_check_branch
      %111 = sbr.rel (0) target = $region17
    $region16: #{down_forward.7} parent=1 // pred_region
      %s113 = ssub.s32 2048, 2048
      %114 = vsyncadd [#allocation3], %s113
      %s115 = sshll.u32 [#allocation2], 4
      %s116 = int_to_ptr.vmem [resolvable:$true] %s115
      %121 = dma.vmem_to_hbm [thread:$0]  %s116, 2048, %s3, [#allocation3], 128, 128, 8
    $region17: #{down_forward.7} parent=1 // pred_fallthru
      _
    // Predicated region
    $region18: #{down_forward.7} parent=1 // pred_check
      _
    $region19: #{down_forward.7} parent=1 // pred_check_branch
      %123 = sbr.rel (0) target = $region21
    $region20: #{down_forward.7} parent=1 // pred_region
      %124 = dma.done [#allocation3], 2048
    $region21: #{down_forward.7} parent=1 // pred_fallthru
      _
    %125 = vsyncpa [#allocation3], 1

// kernel: down_forward.6
$region0: #{down_forward.6}
  #allocation0 [shape = 'u32[]', space=smem, size = 0x4, offset = 0x4, fixed_abs, tag = 'smem constant byte address 0x4 - core index']
  #allocation1 [shape = 'u32[144,128]{1,0:T(1,128)}', space=vmem, size = 0x12000, scoped, tag = 'internal scratch']
  %s0 = inlined_call_operand.vmem [shape: f32[128,400], index: 0, kind: input, shape index: {}]
  %s1 = inlined_call_operand.vmem [shape: f32[400,16], index: 1, kind: input, shape index: {}]
  %s2 = inlined_call_operand.vmem [shape: f32[1,16], index: 2, kind: input, shape index: {}]
  %s3 = inlined_call_operand.vmem [shape: f32[128,16], index: 3, kind: output, shape index: {}]
  %s4 = sld [smem:[#allocation0]]
  $region22: #{down_forward.6} parent=0
    _
  %s6 = ssub.s32 1, %s4
  %s7 = scalar_select 0, %s6, %s4
  // Predicated region
  $region2: #{down_forward.6} parent=0 // pred_check
    _
  $region3: #{down_forward.6} parent=0 // pred_check_branch
    %9 = sbr.rel (0) target = $region5
  $region4: #{down_forward.6} parent=0 // pred_region
    _
  $region5: #{down_forward.6} parent=0 // pred_fallthru
    _
  // Predicated region
  $region6: #{down_forward.6} parent=0 // pred_check
    _
  $region7: #{down_forward.6} parent=0 // pred_check_branch
    %11 = sbr.rel (0) target = $region9
  $region8: #{down_forward.6} parent=0 // pred_region
    _
  $region9: #{down_forward.6} parent=0 // pred_fallthru
    _
  // Predicated region
  $region10: #{down_forward.6} parent=0 // pred_check
    _
  $region11: #{down_forward.6} parent=0 // pred_check_branch
    %13 = sbr.rel (0) target = $region13
  $region12: #{down_forward.6} parent=0 // pred_region
    _
  $region13: #{down_forward.6} parent=0 // pred_fallthru
    _
  %v14 = vld [vmem:[%s0] sm:$0xff]
  %v15 = vld [vmem:[%s0 + $0x8] sm:$0xff]
  %v16 = vld [vmem:[%s0 + $0x10] sm:$0xff]
  %v17 = vld [vmem:[%s0 + $0x18] sm:$0xff]
  %v18 = vld [vmem:[%s0 + $0x20] sm:$0xff]
  %v19 = vld [vmem:[%s0 + $0x28] sm:$0xff]
  %v20 = vld [vmem:[%s0 + $0x30] sm:$0xff]
  %v21 = vld [vmem:[%s0 + $0x38] sm:$0xff]
  %v22 = vld [vmem:[%s0 + $0x40] sm:$0xff]
  %v23 = vld [vmem:[%s0 + $0x48] sm:$0xff]
  %v24 = vld [vmem:[%s0 + $0x50] sm:$0xff]
  %v25 = vld [vmem:[%s0 + $0x58] sm:$0xff]
  %v26 = vld [vmem:[%s0 + $0x60] sm:$0xff]
  %v27 = vld [vmem:[%s0 + $0x68] sm:$0xff]
  %v28 = vld [vmem:[%s0 + $0x70] sm:$0xff]
  %v29 = vld [vmem:[%s0 + $0x78] sm:$0xff]
  %v30 = vld [vmem:[%s0 + $0x80] sm:$0xff]
  %v31 = vld [vmem:[%s0 + $0x88] sm:$0xff]
  %v32 = vld [vmem:[%s0 + $0x90] sm:$0xff]
  %v33 = vld [vmem:[%s0 + $0x98] sm:$0xff]
  %v34 = vld [vmem:[%s0 + $0xa0] sm:$0xff]
  %v35 = vld [vmem:[%s0 + $0xa8] sm:$0xff]
  %v36 = vld [vmem:[%s0 + $0xb0] sm:$0xff]
  %v37 = vld [vmem:[%s0 + $0xb8] sm:$0xff]
  %v38 = vld [vmem:[%s0 + $0xc0] sm:$0xff]
  %v39 = vld [vmem:[%s0 + $0xc8] sm:$0xff]
  %v40 = vld [vmem:[%s0 + $0xd0] sm:$0xff]
  %v41 = vld [vmem:[%s0 + $0xd8] sm:$0xff]
  %v42 = vld [vmem:[%s0 + $0xe0] sm:$0xff]
  %v43 = vld [vmem:[%s0 + $0xe8] sm:$0xff]
  %v44 = vld [vmem:[%s0 + $0xf0] sm:$0xff]
  %v45 = vld [vmem:[%s0 + $0xf8] sm:$0xff]
  %v46 = vld [vmem:[%s0 + $0x100] sm:$0xff]
  %v47 = vld [vmem:[%s0 + $0x108] sm:$0xff]
  %v48 = vld [vmem:[%s0 + $0x110] sm:$0xff]
  %v49 = vld [vmem:[%s0 + $0x118] sm:$0xff]
  %v50 = vld [vmem:[%s0 + $0x120] sm:$0xff]
  %v51 = vld [vmem:[%s0 + $0x128] sm:$0xff]
  %v52 = vld [vmem:[%s0 + $0x130] sm:$0xff]
  %v53 = vld [vmem:[%s0 + $0x138] sm:$0xff]
  %v54 = vld [vmem:[%s0 + $0x140] sm:$0xff]
  %v55 = vld [vmem:[%s0 + $0x148] sm:$0xff]
  %v56 = vld [vmem:[%s0 + $0x150] sm:$0xff]
  %v57 = vld [vmem:[%s0 + $0x158] sm:$0xff]
  %v58 = vld [vmem:[%s0 + $0x160] sm:$0xff]
  %v59 = vld [vmem:[%s0 + $0x168] sm:$0xff]
  %v60 = vld [vmem:[%s0 + $0x170] sm:$0xff]
  %v61 = vld [vmem:[%s0 + $0x178] sm:$0xff]
  %v62 = vld [vmem:[%s0 + $0x180] sm:$0xff]
  %v63 = vld [vmem:[%s0 + $0x188] sm:$0xff]
  %v64 = vld [vmem:[%s0 + $0x190] sm:$0xff]
  %v65 = vld [vmem:[%s0 + $0x198] sm:$0xff]
  %v66 = vld [vmem:[%s0 + $0x1a0] sm:$0xff]
  %v67 = vld [vmem:[%s0 + $0x1a8] sm:$0xff]
  %v68 = vld [vmem:[%s0 + $0x1b0] sm:$0xff]
  %v69 = vld [vmem:[%s0 + $0x1b8] sm:$0xff]
  %v70 = vld [vmem:[%s0 + $0x1c0] sm:$0xff]
  %v71 = vld [vmem:[%s0 + $0x1c8] sm:$0xff]
  %v72 = vld [vmem:[%s0 + $0x1d0] sm:$0xff]
  %v73 = vld [vmem:[%s0 + $0x1d8] sm:$0xff]
  %v74 = vld [vmem:[%s0 + $0x1e0] sm:$0xff]
  %v75 = vld [vmem:[%s0 + $0x1e8] sm:$0xff]
  %v76 = vld [vmem:[%s0 + $0x1f0] sm:$0xff]
  %v77 = vld [vmem:[%s0 + $0x1f8] sm:$0xff]
  %v78 = vld [vmem:[%s1] sm:$0xff]
  %v79 = vld [vmem:[%s1 + $0x8] sm:$0xff]
  %v80 = vld [vmem:[%s1 + $0x10] sm:$0xff]
  %v81 = vld [vmem:[%s1 + $0x18] sm:$0xff]
  %v82 = vld [vmem:[%s1 + $0x20] sm:$0xff]
  %v83 = vld [vmem:[%s1 + $0x28] sm:$0xff]
  %v84 = vld [vmem:[%s1 + $0x30] sm:$0xff]
  %v85 = vld [vmem:[%s1 + $0x38] sm:$0xff]
  %v86 = vld [vmem:[%s1 + $0x40] sm:$0xff]
  %v87 = vld [vmem:[%s1 + $0x48] sm:$0xff]
  %v88 = vld [vmem:[%s1 + $0x50] sm:$0xff]
  %v89 = vld [vmem:[%s1 + $0x58] sm:$0xff]
  %v90 = vld [vmem:[%s1 + $0x60] sm:$0xff]
  %v91 = vld [vmem:[%s1 + $0x68] sm:$0xff]
  %v92 = vld [vmem:[%s1 + $0x70] sm:$0xff]
  %v93 = vld [vmem:[%s1 + $0x78] sm:$0xff]
  %v94 = vld [vmem:[%s1 + $0x80] sm:$0xff]
  %v95 = vld [vmem:[%s1 + $0x88] sm:$0xff]
  %v96 = vld [vmem:[%s1 + $0x90] sm:$0xff]
  %v97 = vld [vmem:[%s1 + $0x98] sm:$0xff]
  %v98 = vld [vmem:[%s1 + $0xa0] sm:$0xff]
  %v99 = vld [vmem:[%s1 + $0xa8] sm:$0xff]
  %v100 = vld [vmem:[%s1 + $0xb0] sm:$0xff]
  %v101 = vld [vmem:[%s1 + $0xb8] sm:$0xff]
  %v102 = vld [vmem:[%s1 + $0xc0] sm:$0xff]
  %v103 = vld [vmem:[%s1 + $0xc8] sm:$0xff]
  %v104 = vld [vmem:[%s1 + $0xd0] sm:$0xff]
  %v105 = vld [vmem:[%s1 + $0xd8] sm:$0xff]
  %v106 = vld [vmem:[%s1 + $0xe0] sm:$0xff]
  %v107 = vld [vmem:[%s1 + $0xe8] sm:$0xff]
  %v108 = vld [vmem:[%s1 + $0xf0] sm:$0xff]
  %v109 = vld [vmem:[%s1 + $0xf8] sm:$0xff]
  %v110 = vld [vmem:[%s1 + $0x100] sm:$0xff]
  %v111 = vld [vmem:[%s1 + $0x108] sm:$0xff]
  %v112 = vld [vmem:[%s1 + $0x110] sm:$0xff]
  %v113 = vld [vmem:[%s1 + $0x118] sm:$0xff]
  %v114 = vld [vmem:[%s1 + $0x120] sm:$0xff]
  %v115 = vld [vmem:[%s1 + $0x128] sm:$0xff]
  %v116 = vld [vmem:[%s1 + $0x130] sm:$0xff]
  %v117 = vld [vmem:[%s1 + $0x138] sm:$0xff]
  %v118 = vld [vmem:[%s1 + $0x140] sm:$0xff]
  %v119 = vld [vmem:[%s1 + $0x148] sm:$0xff]
  %v120 = vld [vmem:[%s1 + $0x150] sm:$0xff]
  %v121 = vld [vmem:[%s1 + $0x158] sm:$0xff]
  %v122 = vld [vmem:[%s1 + $0x160] sm:$0xff]
  %v123 = vld [vmem:[%s1 + $0x168] sm:$0xff]
  %v124 = vld [vmem:[%s1 + $0x170] sm:$0xff]
  %v125 = vld [vmem:[%s1 + $0x178] sm:$0xff]
  %v126 = vld [vmem:[%s1 + $0x180] sm:$0xff]
  %v127 = vld [vmem:[%s1 + $0x188] sm:$0xff]
  %v128 = vld [vmem:[%s2] sm:$0x1]
  %v130 = vlaneseq
  %v131 = vshrl.u32 %v130, 7
  %v132 = vsub.s32 0, %v131
  %v133 = vrot.slane %v128, %v132
  %vm135 = vcmask 130048
  %v137 = vsel %vm135, %v17, 0
  %v140 = vsel %vm135, %v21, 0
  %v143 = vsel %vm135, %v25, 0
  %v146 = vsel %vm135, %v29, 0
  %v149 = vsel %vm135, %v33, 0
  %v152 = vsel %vm135, %v37, 0
  %v155 = vsel %vm135, %v41, 0
  %v158 = vsel %vm135, %v45, 0
  %v161 = vsel %vm135, %v49, 0
  %v164 = vsel %vm135, %v53, 0
  %v167 = vsel %vm135, %v57, 0
  %v170 = vsel %vm135, %v61, 0
  %v173 = vsel %vm135, %v65, 0
  %v176 = vsel %vm135, %v69, 0
  %v179 = vsel %vm135, %v73, 0
  %v182 = vsel %vm135, %v77, 0
  %184 = vmatprep.subr.mxu0 0.0
  %185 = vmatpush1.msra.mxu0 %v78
  %186 = vmatprep.subr.mxu0 0.0
  %187 = vmatpush1.msra.mxu0 %v79
  %188 = vmatprep.subr.mxu0 0.0
  %189 = vmatpush1.msra.mxu0 %v80
  %190 = vmatprep.subr.mxu0 0.0
  %191 = vmatpush1.msra.mxu0 %v81
  %192 = vmatprep.subr.mxu0 0.0
  %193 = vmatpush1.msra.mxu0 %v82
  %194 = vmatprep.subr.mxu0 0.0
  %195 = vmatpush1.msra.mxu0 %v83
  %196 = vmatprep.subr.mxu0 0.0
  %197 = vmatpush1.msra.mxu0 %v84
  %198 = vmatprep.subr.mxu0 0.0
  %199 = vmatpush1.msra.mxu0 %v85
  %200 = vmatprep.subr.mxu0 0.0
  %201 = vmatpush1.msra.mxu0 %v86
  %202 = vmatprep.subr.mxu0 0.0
  %203 = vmatpush1.msra.mxu0 %v87
  %204 = vmatprep.subr.mxu0 0.0
  %205 = vmatpush1.msra.mxu0 %v88
  %206 = vmatprep.subr.mxu0 0.0
  %207 = vmatpush1.msra.mxu0 %v89
  %208 = vmatprep.subr.mxu0 0.0
  %209 = vmatpush1.msra.mxu0 %v90
  %210 = vmatprep.subr.mxu0 0.0
  %211 = vmatpush1.msra.mxu0 %v91
  %212 = vmatprep.subr.mxu0 0.0
  %213 = vmatpush1.msra.mxu0 %v92
  %214 = vmatprep.subr.mxu0 0.0
  %215 = vmatpush1.msra.mxu0 %v93
  %216 = vmatprep.subr.mxu0 0.0
  %217 = vmatpush1.msra.mxu0 %v94
  %218 = vmatprep.subr.mxu0 0.0
  %219 = vmatpush1.msra.mxu0 %v95
  %220 = vmatprep.subr.mxu0 0.0
  %221 = vmatpush1.msra.mxu0 %v96
  %222 = vmatprep.subr.mxu0 0.0
  %223 = vmatpush1.msra.mxu0 %v97
  %224 = vmatprep.subr.mxu0 0.0
  %225 = vmatpush1.msra.mxu0 %v98
  %226 = vmatprep.subr.mxu0 0.0
  %227 = vmatpush1.msra.mxu0 %v99
  %228 = vmatprep.subr.mxu0 0.0
  %229 = vmatpush1.msra.mxu0 %v100
  %230 = vmatprep.subr.mxu0 0.0
  %231 = vmatpush1.msra.mxu0 %v101
  %232 = vmatprep.subr.mxu0 0.0
  %233 = vmatpush1.msra.mxu0 %v102
  %234 = vmatprep.subr.mxu0 0.0
  %235 = vmatpush1.msra.mxu0 %v103
  %236 = vmatprep.subr.mxu0 0.0
  %237 = vmatpush1.msra.mxu0 %v104
  %238 = vmatprep.subr.mxu0 0.0
  %239 = vmatpush1.msra.mxu0 %v105
  %240 = vmatprep.subr.mxu0 0.0
  %241 = vmatpush1.msra.mxu0 %v106
  %242 = vmatprep.subr.mxu0 0.0
  %243 = vmatpush1.msra.mxu0 %v107
  %244 = vmatprep.subr.mxu0 0.0
  %245 = vmatpush1.msra.mxu0 %v108
  %246 = vmatprep.subr.mxu0 0.0
  %247 = vmatpush1.msra.mxu0 %v109
  %248 = vmatprep.mubr.f32.mxu0 %v15
  %249 = vmatmul.mubr.f32.gmra.mrb[0].mxu0 %v14
  %v250 = vpop.f32.mrb[0].mxu0
  %v251 = vadd.f32 %v133, %v250
  %v252 = vpop.f32.mrb[0].mxu0
  %253 = vmatprep.mubr.f32.mxu0 %v19
  %254 = vmatmul.mubr.f32.gmra.mrb[0].mxu0 %v18
  %v255 = vpop.f32.mrb[0].mxu0
  %v256 = vadd.f32 %v133, %v255
  %v257 = vpop.f32.mrb[0].mxu0
  %258 = vmatprep.mubr.f32.mxu0 %v23
  %259 = vmatmul.mubr.f32.gmra.mrb[0].mxu0 %v22
  %v260 = vpop.f32.mrb[0].mxu0
  %v261 = vadd.f32 %v133, %v260
  %v262 = vpop.f32.mrb[0].mxu0
  %263 = vmatprep.mubr.f32.mxu0 %v27
  %264 = vmatmul.mubr.f32.gmra.mrb[0].mxu0 %v26
  %v265 = vpop.f32.mrb[0].mxu0
  %v266 = vadd.f32 %v133, %v265
  %v267 = vpop.f32.mrb[0].mxu0
  %268 = vmatprep.mubr.f32.mxu0 %v31
  %269 = vmatmul.mubr.f32.gmra.mrb[0].mxu0 %v30
  %v270 = vpop.f32.mrb[0].mxu0
  %v271 = vadd.f32 %v133, %v270
  %v272 = vpop.f32.mrb[0].mxu0
  %273 = vmatprep.mubr.f32.mxu0 %v35
  %274 = vmatmul.mubr.f32.gmra.mrb[0].mxu0 %v34
  %v275 = vpop.f32.mrb[0].mxu0
  %v276 = vadd.f32 %v133, %v275
  %v277 = vpop.f32.mrb[0].mxu0
  %278 = vmatprep.mubr.f32.mxu0 %v39
  %279 = vmatmul.mubr.f32.gmra.mrb[0].mxu0 %v38
  %v280 = vpop.f32.mrb[0].mxu0
  %v281 = vadd.f32 %v133, %v280
  %v282 = vpop.f32.mrb[0].mxu0
  %283 = vmatprep.mubr.f32.mxu0 %v43
  %284 = vmatmul.mubr.f32.gmra.mrb[0].mxu0 %v42
  %v285 = vpop.f32.mrb[0].mxu0
  %v286 = vadd.f32 %v133, %v285
  %v287 = vpop.f32.mrb[0].mxu0
  %288 = vmatprep.mubr.f32.mxu0 %v47
  %289 = vmatmul.mubr.f32.gmra.mrb[0].mxu0 %v46
  %v290 = vpop.f32.mrb[0].mxu0
  %v291 = vadd.f32 %v133, %v290
  %v292 = vpop.f32.mrb[0].mxu0
  %293 = vmatprep.mubr.f32.mxu0 %v51
  %294 = vmatmul.mubr.f32.gmra.mrb[0].mxu0 %v50
  %v295 = vpop.f32.mrb[0].mxu0
  %v296 = vadd.f32 %v133, %v295
  %v297 = vpop.f32.mrb[0].mxu0
  %298 = vmatprep.mubr.f32.mxu0 %v55
  %299 = vmatmul.mubr.f32.gmra.mrb[0].mxu0 %v54
  %v300 = vpop.f32.mrb[0].mxu0
  %v301 = vadd.f32 %v133, %v300
  %v302 = vpop.f32.mrb[0].mxu0
  %303 = vmatprep.mubr.f32.mxu0 %v59
  %304 = vmatmul.mubr.f32.gmra.mrb[0].mxu0 %v58
  %v305 = vpop.f32.mrb[0].mxu0
  %v306 = vadd.f32 %v133, %v305
  %v307 = vpop.f32.mrb[0].mxu0
  %308 = vmatprep.mubr.f32.mxu0 %v63
  %309 = vmatmul.mubr.f32.gmra.mrb[0].mxu0 %v62
  %v310 = vpop.f32.mrb[0].mxu0
  %v311 = vadd.f32 %v133, %v310
  %v312 = vpop.f32.mrb[0].mxu0
  %313 = vmatprep.mubr.f32.mxu0 %v67
  %314 = vmatmul.mubr.f32.gmra.mrb[0].mxu0 %v66
  %v315 = vpop.f32.mrb[0].mxu0
  %v316 = vadd.f32 %v133, %v315
  %v317 = vpop.f32.mrb[0].mxu0
  %318 = vmatprep.mubr.f32.mxu0 %v71
  %319 = vmatmul.mubr.f32.gmra.mrb[0].mxu0 %v70
  %v320 = vpop.f32.mrb[0].mxu0
  %v321 = vadd.f32 %v133, %v320
  %v322 = vpop.f32.mrb[0].mxu0
  %323 = vmatprep.mubr.f32.mxu0 %v75
  %324 = vmatmul.mubr.f32.gmra.mrb[0].mxu0 %v74
  %v325 = vpop.f32.mrb[0].mxu0
  %v326 = vadd.f32 %v133, %v325
  %v327 = vpop.f32.mrb[0].mxu0
  %328 = vdwg.mxu0
  %329 = vmatprep.subr.mxu0 0.0
  %330 = vmatpush1.msra.mxu0 %v110
  %331 = vmatprep.subr.mxu0 0.0
  %332 = vmatpush1.msra.mxu0 %v111
  %333 = vmatprep.subr.mxu0 0.0
  %334 = vmatpush1.msra.mxu0 %v112
  %335 = vmatprep.subr.mxu0 0.0
  %336 = vmatpush1.msra.mxu0 %v113
  %337 = vmatprep.subr.mxu0 0.0
  %338 = vmatpush1.msra.mxu0 %v114
  %339 = vmatprep.subr.mxu0 0.0
  %340 = vmatpush1.msra.mxu0 %v115
  %341 = vmatprep.subr.mxu0 0.0
  %342 = vmatpush1.msra.mxu0 %v116
  %343 = vmatprep.subr.mxu0 0.0
  %344 = vmatpush1.msra.mxu0 %v117
  %345 = vmatprep.subr.mxu0 0.0
  %346 = vmatpush1.msra.mxu0 %v118
  %347 = vmatprep.subr.mxu0 0.0
  %348 = vmatpush1.msra.mxu0 %v119
  %349 = vmatprep.subr.mxu0 0.0
  %350 = vmatpush1.msra.mxu0 %v120
  %351 = vmatprep.subr.mxu0 0.0
  %352 = vmatpush1.msra.mxu0 %v121
  %353 = vmatprep.subr.mxu0 0.0
  %354 = vmatpush1.msra.mxu0 %v122
  %355 = vmatprep.subr.mxu0 0.0
  %356 = vmatpush1.msra.mxu0 %v123
  %357 = vmatprep.subr.mxu0 0.0
  %358 = vmatpush1.msra.mxu0 %v124
  %359 = vmatprep.subr.mxu0 0.0
  %360 = vmatpush1.msra.mxu0 %v125
  %361 = vmatprep.subr.mxu0 0.0
  %362 = vmatpush1.msra.mxu0 %v126
  %363 = vmatprep.subr.mxu0 0.0
  %364 = vmatpush1.msra.mxu0 %v127
  %365 = vmatprep.subr.mxu0 0.0
  %366 = vmatpush1.msra.mxu0 0.0
  %367 = vmatprep.subr.mxu0 0.0
  %368 = vmatpush1.msra.mxu0 0.0
  %369 = vmatprep.subr.mxu0 0.0
  %370 = vmatpush1.msra.mxu0 0.0
  %371 = vmatprep.subr.mxu0 0.0
  %372 = vmatpush1.msra.mxu0 0.0
  %373 = vmatprep.subr.mxu0 0.0
  %374 = vmatpush1.msra.mxu0 0.0
  %375 = vmatprep.subr.mxu0 0.0
  %376 = vmatpush1.msra.mxu0 0.0
  %377 = vmatprep.subr.mxu0 0.0
  %378 = vmatpush1.msra.mxu0 0.0
  %379 = vmatprep.subr.mxu0 0.0
  %380 = vmatpush1.msra.mxu0 0.0
  %381 = vmatprep.subr.mxu0 0.0
  %382 = vmatpush1.msra.mxu0 0.0
  %383 = vmatprep.subr.mxu0 0.0
  %384 = vmatpush1.msra.mxu0 0.0
  %385 = vmatprep.subr.mxu0 0.0
  %386 = vmatpush1.msra.mxu0 0.0
  %387 = vmatprep.subr.mxu0 0.0
  %388 = vmatpush1.msra.mxu0 0.0
  %389 = vmatprep.subr.mxu0 0.0
  %390 = vmatpush1.msra.mxu0 0.0
  %391 = vmatprep.subr.mxu0 0.0
  %392 = vmatpush1.msra.mxu0 0.0
  %393 = vmatprep.mubr.f32.mxu0 %v137
  %394 = vmatmul.mubr.f32.gmra.mrb[0].mxu0 %v16
  %v395 = vpop.f32.mrb[0].mxu0
  %v396 = vadd.f32 %v251, %v395
  %v397 = vpop.f32.mrb[0].mxu0
  %398 = vmatprep.mubr.f32.mxu0 %v140
  %399 = vmatmul.mubr.f32.gmra.mrb[0].mxu0 %v20
  %v400 = vpop.f32.mrb[0].mxu0
  %v401 = vadd.f32 %v256, %v400
  %v402 = vpop.f32.mrb[0].mxu0
  %403 = vmatprep.mubr.f32.mxu0 %v143
  %404 = vmatmul.mubr.f32.gmra.mrb[0].mxu0 %v24
  %v405 = vpop.f32.mrb[0].mxu0
  %v406 = vadd.f32 %v261, %v405
  %v407 = vpop.f32.mrb[0].mxu0
  %408 = vmatprep.mubr.f32.mxu0 %v146
  %409 = vmatmul.mubr.f32.gmra.mrb[0].mxu0 %v28
  %v410 = vpop.f32.mrb[0].mxu0
  %v411 = vadd.f32 %v266, %v410
  %v412 = vpop.f32.mrb[0].mxu0
  %413 = vmatprep.mubr.f32.mxu0 %v149
  %414 = vmatmul.mubr.f32.gmra.mrb[0].mxu0 %v32
  %v415 = vpop.f32.mrb[0].mxu0
  %v416 = vadd.f32 %v271, %v415
  %v417 = vpop.f32.mrb[0].mxu0
  %418 = vmatprep.mubr.f32.mxu0 %v152
  %419 = vmatmul.mubr.f32.gmra.mrb[0].mxu0 %v36
  %v420 = vpop.f32.mrb[0].mxu0
  %v421 = vadd.f32 %v276, %v420
  %v422 = vpop.f32.mrb[0].mxu0
  %423 = vmatprep.mubr.f32.mxu0 %v155
  %424 = vmatmul.mubr.f32.gmra.mrb[0].mxu0 %v40
  %v425 = vpop.f32.mrb[0].mxu0
  %v426 = vadd.f32 %v281, %v425
  %v427 = vpop.f32.mrb[0].mxu0
  %428 = vmatprep.mubr.f32.mxu0 %v158
  %429 = vmatmul.mubr.f32.gmra.mrb[0].mxu0 %v44
  %v430 = vpop.f32.mrb[0].mxu0
  %v431 = vadd.f32 %v286, %v430
  %v432 = vpop.f32.mrb[0].mxu0
  %433 = vmatprep.mubr.f32.mxu0 %v161
  %434 = vmatmul.mubr.f32.gmra.mrb[0].mxu0 %v48
  %v435 = vpop.f32.mrb[0].mxu0
  %v436 = vadd.f32 %v291, %v435
  %v437 = vpop.f32.mrb[0].mxu0
  %438 = vmatprep.mubr.f32.mxu0 %v164
  %439 = vmatmul.mubr.f32.gmra.mrb[0].mxu0 %v52
  %v440 = vpop.f32.mrb[0].mxu0
  %v441 = vadd.f32 %v296, %v440
  %v442 = vpop.f32.mrb[0].mxu0
  %443 = vmatprep.mubr.f32.mxu0 %v167
  %444 = vmatmul.mubr.f32.gmra.mrb[0].mxu0 %v56
  %v445 = vpop.f32.mrb[0].mxu0
  %v446 = vadd.f32 %v301, %v445
  %v447 = vpop.f32.mrb[0].mxu0
  %448 = vmatprep.mubr.f32.mxu0 %v170
  %449 = vmatmul.mubr.f32.gmra.mrb[0].mxu0 %v60
  %v450 = vpop.f32.mrb[0].mxu0
  %v451 = vadd.f32 %v306, %v450
  %v452 = vpop.f32.mrb[0].mxu0
  %453 = vmatprep.mubr.f32.mxu0 %v173
  %454 = vmatmul.mubr.f32.gmra.mrb[0].mxu0 %v64
  %v455 = vpop.f32.mrb[0].mxu0
  %v456 = vadd.f32 %v311, %v455
  %v457 = vpop.f32.mrb[0].mxu0
  %458 = vmatprep.mubr.f32.mxu0 %v176
  %459 = vmatmul.mubr.f32.gmra.mrb[0].mxu0 %v68
  %v460 = vpop.f32.mrb[0].mxu0
  %v461 = vadd.f32 %v316, %v460
  %v462 = vpop.f32.mrb[0].mxu0
  %463 = vmatprep.mubr.f32.mxu0 %v179
  %464 = vmatmul.mubr.f32.gmra.mrb[0].mxu0 %v72
  %v465 = vpop.f32.mrb[0].mxu0
  %v466 = vadd.f32 %v321, %v465
  %v467 = vpop.f32.mrb[0].mxu0
  %468 = vmatprep.mubr.f32.mxu0 %v182
  %469 = vmatmul.mubr.f32.gmra.mrb[0].mxu0 %v76
  %v470 = vpop.f32.mrb[0].mxu0
  %v471 = vadd.f32 %v326, %v470
  %v472 = vpop.f32.mrb[0].mxu0
  %473 = vdwg.mxu0
  %474 = vst.msk [vmem:[%s3] sm:$0xff] %vm135, %v396
  %475 = vst.msk [vmem:[%s3 + $0x8] sm:$0xff] %vm135, %v401
  %476 = vst.msk [vmem:[%s3 + $0x10] sm:$0xff] %vm135, %v406
  %477 = vst.msk [vmem:[%s3 + $0x18] sm:$0xff] %vm135, %v411
  %478 = vst.msk [vmem:[%s3 + $0x20] sm:$0xff] %vm135, %v416
  %479 = vst.msk [vmem:[%s3 + $0x28] sm:$0xff] %vm135, %v421
  %480 = vst.msk [vmem:[%s3 + $0x30] sm:$0xff] %vm135, %v426
  %481 = vst.msk [vmem:[%s3 + $0x38] sm:$0xff] %vm135, %v431
  %482 = vst.msk [vmem:[%s3 + $0x40] sm:$0xff] %vm135, %v436
  %483 = vst.msk [vmem:[%s3 + $0x48] sm:$0xff] %vm135, %v441
  %484 = vst.msk [vmem:[%s3 + $0x50] sm:$0xff] %vm135, %v446
  %485 = vst.msk [vmem:[%s3 + $0x58] sm:$0xff] %vm135, %v451
  %486 = vst.msk [vmem:[%s3 + $0x60] sm:$0xff] %vm135, %v456
  %487 = vst.msk [vmem:[%s3 + $0x68] sm:$0xff] %vm135, %v461
  %488 = vst.msk [vmem:[%s3 + $0x70] sm:$0xff] %vm135, %v466
  %489 = vst.msk [vmem:[%s3 + $0x78] sm:$0xff] %vm135, %v471
  // Predicated region
  $region14: #{down_forward.6} parent=0 // pred_check
    _
  $region15: #{down_forward.6} parent=0 // pred_check_branch
    %491 = sbr.rel (0) target = $region17
  $region16: #{down_forward.6} parent=0 // pred_region
    _
  $region17: #{down_forward.6} parent=0 // pred_fallthru
    _
  // Predicated region
  $region18: #{down_forward.6} parent=0 // pred_check
    _
  $region19: #{down_forward.6} parent=0 // pred_check_branch
    %493 = sbr.rel (0) target = $region21
  $region20: #{down_forward.6} parent=0 // pred_region
    _
  $region21: #{down_forward.6} parent=0 // pred_fallthru
    _

</llo_original>
